<compile_context>
chip_gen: v6e
topology: v6e:2x2x1
jax: 0.10.0
libtpu: 0.0.40
codegen_flags: <defaults>
</compile_context>

<pallas_src>
import math

import jax
import jax.numpy as jnp
from jax.experimental import pallas as pl
from jax.experimental.pallas import tpu as pltpu


# ---------------------------------------------------------------------------
# Frequency generation (buffer setup -> plain JAX glue)
# ---------------------------------------------------------------------------
def geometric_frequencies(encoding_period: float, n_frequencies: int):
    exponent = jnp.arange(n_frequencies, 0, -1, dtype=jnp.float32) / n_frequencies
    return 2.0 * math.pi * jnp.power(1.0 / encoding_period, exponent)


def linear_frequencies(encoding_period: float, n_frequencies: int):
    return 2.0 * math.pi * jnp.arange(1, 1 + n_frequencies, dtype=jnp.float32) / encoding_period


def generate_frequencies(encoding_period: float, n_frequencies: int,
                         encoding_frequencies: str = "linear"):
    if encoding_frequencies == "linear":
        return linear_frequencies(encoding_period, n_frequencies)
    elif encoding_frequencies == "geometric":
        return geometric_frequencies(encoding_period, n_frequencies)
    raise ValueError(f"Unknown frequency generator: {encoding_frequencies}")


# ---------------------------------------------------------------------------
# Pallas kernel: angle = pos_packed @ scale  (MXU), then one cos(angle + phase)
# where phase = -pi/2 on sin lanes.  Single lane-dense store.
# ---------------------------------------------------------------------------
def _ape_kernel(pos_ref, scale_ref, phase_ref, out_ref):
    # pos_ref   : (tile_n, packed_k)            VMEM f32
    # scale_ref : (packed_k, packed_width)      VMEM f32 (grid-resident constant)
    # phase_ref : (1, packed_width)             VMEM f32 (grid-resident constant)
    # out_ref   : (tile_n, packed_width)        VMEM
    angle = jnp.dot(pos_ref[...], scale_ref[...],
                    preferred_element_type=jnp.float32)
    out_ref[...] = jnp.cos(angle + phase_ref[...]).astype(out_ref.dtype)


# ---------------------------------------------------------------------------
# Module-equivalent wrapper
# ---------------------------------------------------------------------------
class AbsolutePositionalEncoding:
    def __init__(self, embed_dim: int, encoding_period: float,
                 n_dimensions: int = 2, encoding_frequencies: str = "linear",
                 out_dtype=jnp.float32):
        if embed_dim % (n_dimensions * 2) != 0:
            raise ValueError(
                f"Embedding dimension {embed_dim} must be divisible by 2 * n_dimensions")
        self.embed_dim = embed_dim
        self.encoding_period = encoding_period
        self.n_dimensions = n_dimensions
        self.n_frequencies = embed_dim // n_dimensions // 2
        self.out_dtype = out_dtype
        self.frequencies = generate_frequencies(
            encoding_period, self.n_frequencies, encoding_frequencies)       # (n_freq,)

        # ---- lane packing: smallest g with (g * embed_dim) % 128 == 0 ------
        self.group = 128 // math.gcd(embed_dim, 128)
        self.packed_width = self.group * embed_dim        # multiple of 128
        self.packed_k = self.group * n_dimensions

        # ---- per-dim scale row (zeros outside dim d's lane block) ----------
        per_dim = 2 * self.n_frequencies
        freq_full = jnp.tile(jnp.repeat(self.frequencies, 2), n_dimensions)   # (embed_dim,)
        lane = jnp.arange(embed_dim)
        base_scale = jnp.where(
            (lane // per_dim)[None, :] == jnp.arange(n_dimensions)[:, None],
            freq_full[None, :], 0.0).astype(jnp.float32)                      # (n_dims, embed_dim)
        # block-diagonal over the g packed sub-rows -> (packed_k, packed_width)
        self.scale = jnp.kron(jnp.eye(self.group, dtype=jnp.float32), base_scale)
        # even lane -> cos(angle), odd lane -> sin(angle) = cos(angle - pi/2)
        base_phase = jnp.where((lane % 2) == 1, -0.5 * math.pi, 0.0).astype(jnp.float32)
        self.phase = jnp.tile(base_phase, self.group).reshape(1, self.packed_width)

    # -----------------------------------------------------------------------
    def _choose_tile_rows(self, n_pack: int) -> int:
        # sublane granularity for the output dtype (f32: 8, bf16: 16)
        sub = 16 if self.out_dtype == jnp.bfloat16 else 8
        if n_pack <= sub:
            return n_pack            # block == full array dim -> single grid step
        itemsize = 2 if self.out_dtype == jnp.bfloat16 else 4
        out_row_bytes = self.packed_width * itemsize
        # ~4 MiB per output buffer; double-buffered = 8 MiB + tiny pos/scale/phase
        # -> comfortably inside v5e's 16 MiB scoped-VMEM default and v7x's 32 MiB.
        budget = 4 * 1024 * 1024
        tile = max(sub, budget // out_row_bytes)
        # keep >= 2 grid steps so v7x can shard the row axis across its 2 TCs
        tile = min(tile, (n_pack + 1) // 2)
        return max(sub, (tile // sub) * sub)

    # -----------------------------------------------------------------------
    def __call__(self, pos: jnp.ndarray) -> jnp.ndarray:
        # pos: (..., n_dimensions)
        assert pos.shape[-1] == self.n_dimensions
        lead_shape = pos.shape[:-1]
        n_rows = math.prod(lead_shape) if lead_shape else 1
        pos2d = pos.reshape(n_rows, self.n_dimensions).astype(jnp.float32)

        # pad rows only up to the packing group (< g rows of tiny input)
        g = self.group
        n_pad = (-n_rows) % g
        if n_pad:
            pos2d = jnp.pad(pos2d, ((0, n_pad), (0, 0)))
        n_pack = (n_rows + n_pad) // g
        pos_packed = pos2d.reshape(n_pack, self.packed_k)   # contiguous, zero-copy

        tile_n = self._choose_tile_rows(n_pack)
        grid = (pl.cdiv(n_pack, tile_n),)   # ragged last block is clipped by Pallas

        out = pl.pallas_call(
            _ape_kernel,
            out_shape=jax.ShapeDtypeStruct((n_pack, self.packed_width), self.out_dtype),
            grid_spec=pltpu.PrefetchScalarGridSpec(
                num_scalar_prefetch=0,
                grid=grid,
                in_specs=[
                    pl.BlockSpec((tile_n, self.packed_k), lambda i: (i, 0)),
                    # constant index_maps -> stay VMEM-resident across the grid
                    pl.BlockSpec((self.packed_k, self.packed_width), lambda i: (0, 0)),
                    pl.BlockSpec((1, self.packed_width), lambda i: (0, 0)),
                ],
                out_specs=pl.BlockSpec((tile_n, self.packed_width), lambda i: (i, 0)),
            ),
            compiler_params=pltpu.CompilerParams(
                dimension_semantics=("parallel",)),
        )(pos_packed, self.scale, self.phase)

        out = out.reshape(n_pack * g, self.embed_dim)       # contiguous, zero-copy
        if n_pad:
            out = out[:n_rows]                               # only when rows % g != 0
        return out.reshape(*lead_shape, self.embed_dim)


# ---------------------------------------------------------------------------
# Pure-JAX reference (mirrors the PyTorch forward) for validation
# ---------------------------------------------------------------------------
def _reference(pos, frequencies, embed_dim):
    angle = pos[..., None] * frequencies[None, :]            # (..., n_dims, n_freq)
    emb = jnp.stack((jnp.cos(angle), jnp.sin(angle)), axis=-1)
    return emb.reshape(*pos.shape[:-1], embed_dim)


if __name__ == "__main__":
    embed_dim = 32
    encoding_period = 10.0
    n_dimensions = 2
    batch, seq = 2, 8

    key = jax.random.PRNGKey(0)
    pos = jax.random.uniform(key, (batch, seq, n_dimensions),
                             dtype=jnp.float32, minval=-5.0, maxval=5.0)

    ape = AbsolutePositionalEncoding(embed_dim, encoding_period,
                                     n_dimensions, "linear")

    out = jax.block_until_ready(ape(pos))
    ref = _reference(pos, ape.frequencies, embed_dim)
    assert out.shape == (batch, seq, embed_dim)
    # sin is computed as cos(x - pi/2) and the angle comes off the MXU's f32
    # multi-pass path -> a few-ULP-of-angle deviation vs the exact-f32 reference.
    # Outputs live in [-1, 1], so atol=5e-4 is still a tight check.
    assert jnp.allclose(out, ref, atol=5e-4, rtol=1e-5), "mismatch vs reference (case 1)"

    # Second case: row count not a multiple of the packing group and more than
    # one grid step (exercises the ragged last block + >=2-step grid path).
    pos2 = jax.random.uniform(jax.random.PRNGKey(1), (3, 67, n_dimensions),
                              dtype=jnp.float32, minval=-5.0, maxval=5.0)
    out2 = jax.block_until_ready(ape(pos2))
    ref2 = _reference(pos2, ape.frequencies, embed_dim)
    assert out2.shape == (3, 67, embed_dim)
    assert jnp.allclose(out2, ref2, atol=5e-4, rtol=1e-5), "mismatch vs reference (case 2)"

    print("KERNEL_OK")
</pallas_src>

<mosaic_0001>
module attributes {stable_mosaic.version = 11 : i64} {
  func.func @_ape_kernel(%arg0: i32, %arg1: memref<4x8xf32, #tpu.memory_space<vmem>>, %arg2: memref<8x128xf32, #tpu.memory_space<vmem>>, %arg3: memref<1x128xf32, #tpu.memory_space<vmem>>, %arg4: memref<4x128xf32, #tpu.memory_space<vmem>>) attributes {dimension_semantics = [#tpu.dimension_semantics<parallel>], iteration_bounds = array<i64: 1>, scalar_prefetch = 0 : i64, scratch_operands = 0 : i64, tpu.core_type = #tpu.core_type<tc>, window_params = [{transform_indices = @transform_0, window_bounds = array<i64: 4, 8>}, {pipeline_mode = #tpu.pipeline_mode<synchronous>, transform_indices = @transform_1, window_bounds = array<i64: 8, 128>}, {pipeline_mode = #tpu.pipeline_mode<synchronous>, transform_indices = @transform_2, window_bounds = array<i64: 1, 128>}, {transform_indices = @transform_3, window_bounds = array<i64: 4, 128>}]} {
    %c0 = arith.constant 0 : index
    %c0_0 = arith.constant 0 : index
    %0 = vector.load %arg1[%c0, %c0_0] : memref<4x8xf32, #tpu.memory_space<vmem>>, vector<4x8xf32>
    %c0_1 = arith.constant 0 : index
    %c0_2 = arith.constant 0 : index
    %1 = vector.load %arg2[%c0_1, %c0_2] : memref<8x128xf32, #tpu.memory_space<vmem>>, vector<8x128xf32>
    %cst = arith.constant dense<0.000000e+00> : vector<4x128xf32>
    %2 = tpu.matmul %0, %1, %cst {dimension_numbers = #tpu.dot_dimension_numbers<[1], [0], [0], [1], [0, 0, 1, 1], [], []>} : vector<4x8xf32>, vector<8x128xf32>, vector<4x128xf32> -> vector<4x128xf32>
    %c0_3 = arith.constant 0 : index
    %c0_4 = arith.constant 0 : index
    %3 = vector.load %arg3[%c0_3, %c0_4] : memref<1x128xf32, #tpu.memory_space<vmem>>, vector<1x128xf32>
    %4 = vector.broadcast %3 : vector<1x128xf32> to vector<4x128xf32>
    %5 = arith.addf %2, %4 : vector<4x128xf32>
    %6 = math.cos %5 : vector<4x128xf32>
    %c0_5 = arith.constant 0 : index
    %c0_6 = arith.constant 0 : index
    %7 = vector.load %arg4[%c0_5, %c0_6] : memref<4x128xf32, #tpu.memory_space<vmem>>, vector<4x128xf32>
    tpu.vector_store %arg4[%c0_5, %c0_6], %6 {strides = array<i32>} : memref<4x128xf32, #tpu.memory_space<vmem>>, vector<4x128xf32>,
    return
  }
  func.func @transform_0(%arg0: i32) -> (i32, i32) {
    %c0_i32 = arith.constant 0 : i32
    %c0_i32_0 = arith.constant 0 : i32
    return %arg0, %c0_i32 : i32, i32
  }
  func.func @transform_1(%arg0: i32) -> (i32, i32) {
    %c0_i32 = arith.constant 0 : i32
    %c0_i32_0 = arith.constant 0 : i32
    %c0_i32_1 = arith.constant 0 : i32
    return %c0_i32, %c0_i32_0 : i32, i32
  }
  func.func @transform_2(%arg0: i32) -> (i32, i32) {
    %c0_i32 = arith.constant 0 : i32
    %c0_i32_0 = arith.constant 0 : i32
    %c0_i32_1 = arith.constant 0 : i32
    return %c0_i32, %c0_i32_0 : i32, i32
  }
  func.func @transform_3(%arg0: i32) -> (i32, i32) {
    %c0_i32 = arith.constant 0 : i32
    %c0_i32_0 = arith.constant 0 : i32
    return %arg0, %c0_i32 : i32, i32
  }
}

</mosaic_0001>

<llo_original>
// kernel: tpu_custom_call.1
$region0: #{tpu_custom_call.1}
  #allocation0 [shape = 'u32[]', space=smem, size = 0x4, offset = 0x4, fixed_abs, tag = 'smem constant byte address 0x4 - core index']
  #allocation1 [shape = 'u32[144,128]{1,0:T(1,128)}', space=vmem, size = 0x12000, scoped, tag = 'internal scratch']
  %s0 = inlined_call_operand.hbm [shape: f32[4,8], index: 0, kind: input, shape index: {}]
  %s1 = inlined_call_operand.hbm [shape: f32[8,128], index: 1, kind: input, shape index: {}]
  %s2 = inlined_call_operand.vmem [shape: f32[1,128], index: 2, kind: input, shape index: {}]
  %s3 = inlined_call_operand.hbm [shape: f32[4,128], index: 3, kind: output, shape index: {}]
  %s4 = sld [smem:[#allocation0]]
  $region30: #{tpu_custom_call.1} parent=0
    _
  %s6 = ssub.s32 1, %s4
  %s7 = scalar_select 0, %s6, %s4
  $region1: #{tpu_custom_call.1} parent=0
    #allocation2 [shape = 'u8[2048]{0}', space=vmem, size = 0x800, scoped, tag = 'input window, operand 0, single buffered']
    #allocation3 [shape = 's32[1]{0}', space=sflag, size = 0x4, scoped, tag = 'scoped memory for tpu_custom_call.1']
    #allocation4 [shape = 's32[1]{0}', space=sflag, size = 0x4, scoped, tag = 'scoped memory for tpu_custom_call.1']
    #allocation5 [shape = 'u8[4096]{0}', space=vmem, size = 0x1000, scoped, tag = 'input window, operand 1, single buffered']
    #allocation6 [shape = 's32[1]{0}', space=sflag, size = 0x4, scoped, tag = 'scoped memory for tpu_custom_call.1']
    #allocation7 [shape = 'u8[2048]{0}', space=vmem, size = 0x800, scoped, tag = 'output window, operand 0, single buffered']
    %8 = vsyncpa [#allocation3], 0
    %9 = vsyncpa [#allocation6], 0
    %10 = vsyncpa [#allocation4], 0
    // Predicated region
    $region2: #{tpu_custom_call.1} parent=1 // pred_check
      _
    $region3: #{tpu_custom_call.1} parent=1 // pred_check_branch
      %12 = sbr.rel (0) target = $region5
    $region4: #{tpu_custom_call.1} parent=1 // pred_region
      %s14 = ssub.s32 64, 64
      %15 = vsyncadd [#allocation3], %s14
      %s17 = sshll.u32 [#allocation2], 4
      %s18 = int_to_ptr.vmem [resolvable:$true] %s17
      %20 = dma.hbm_to_vmem [thread:$0]  %s0, 64, %s18, [#allocation3]
    $region5: #{tpu_custom_call.1} parent=1 // pred_fallthru
      _
    // Predicated region
    $region6: #{tpu_custom_call.1} parent=1 // pred_check
      _
    $region7: #{tpu_custom_call.1} parent=1 // pred_check_branch
      %22 = sbr.rel (0) target = $region9
    $region8: #{tpu_custom_call.1} parent=1 // pred_region
      %s24 = ssub.s32 128, 128
      %25 = vsyncadd [#allocation6], %s24
      %s27 = sshll.u32 [#allocation5], 4
      %s28 = int_to_ptr.vmem [resolvable:$true] %s27
      %30 = dma.hbm_to_vmem [thread:$0]  %s1, 128, %s28, [#allocation6]
    $region9: #{tpu_custom_call.1} parent=1 // pred_fallthru
      _
    // Predicated region
    $region10: #{tpu_custom_call.1} parent=1 // pred_check
      _
    $region11: #{tpu_custom_call.1} parent=1 // pred_check_branch
      %32 = sbr.rel (0) target = $region13
    $region12: #{tpu_custom_call.1} parent=1 // pred_region
      _
    $region13: #{tpu_custom_call.1} parent=1 // pred_fallthru
      _
    // Predicated region
    $region14: #{tpu_custom_call.1} parent=1 // pred_check
      _
    $region15: #{tpu_custom_call.1} parent=1 // pred_check_branch
      %34 = sbr.rel (0) target = $region17
    $region16: #{tpu_custom_call.1} parent=1 // pred_region
      %35 = dma.done [#allocation3], 64
    $region17: #{tpu_custom_call.1} parent=1 // pred_fallthru
      _
    // Predicated region
    $region18: #{tpu_custom_call.1} parent=1 // pred_check
      _
    $region19: #{tpu_custom_call.1} parent=1 // pred_check_branch
      %37 = sbr.rel (0) target = $region21
    $region20: #{tpu_custom_call.1} parent=1 // pred_region
      %38 = dma.done [#allocation6], 128
    $region21: #{tpu_custom_call.1} parent=1 // pred_fallthru
      _
    %v39 = vld [vmem:[#allocation2] sm:$0xf]
    %v40 = vld [vmem:[#allocation5] sm:$0xff]
    %v41 = vld [vmem:[%s2] sm:$0x1]
    %v43 = vlaneseq
    %v44 = vshrl.u32 %v43, 7
    %v45 = vsub.s32 0, %v44
    %v46 = vrot.slane %v41, %v45
    %vm48 = vcmask 64512
    %v50 = vsel %vm48, %v39, 0
    %52 = vmatprep.subr.mxu0 0.0
    %53 = vmatpush1.msra.mxu0 0.0
    %54 = vmatprep.subr.mxu0 0.0
    %55 = vmatpush1.msra.mxu0 0.0
    %56 = vmatprep.subr.mxu0 0.0
    %57 = vmatpush1.msra.mxu0 0.0
    %58 = vmatprep.subr.mxu0 0.0
    %59 = vmatpush1.msra.mxu0 0.0
    %60 = vmatprep.subr.mxu0 0.0
    %61 = vmatpush1.msra.mxu0 0.0
    %62 = vmatprep.subr.mxu0 0.0
    %63 = vmatpush1.msra.mxu0 0.0
    %64 = vmatprep.subr.mxu0 0.0
    %65 = vmatpush1.msra.mxu0 0.0
    %66 = vmatprep.subr.mxu0 0.0
    %67 = vmatpush1.msra.mxu0 0.0
    %68 = vmatprep.subr.mxu0 0.0
    %69 = vmatpush1.msra.mxu0 0.0
    %70 = vmatprep.subr.mxu0 0.0
    %71 = vmatpush1.msra.mxu0 0.0
    %72 = vmatprep.subr.mxu0 0.0
    %73 = vmatpush1.msra.mxu0 0.0
    %74 = vmatprep.subr.mxu0 0.0
    %75 = vmatpush1.msra.mxu0 0.0
    %76 = vmatprep.subr.mxu0 0.0
    %77 = vmatpush1.msra.mxu0 0.0
    %78 = vmatprep.subr.mxu0 0.0
    %79 = vmatpush1.msra.mxu0 0.0
    %80 = vmatprep.subr.mxu0 0.0
    %81 = vmatpush1.msra.mxu0 0.0
    %82 = vmatprep.subr.mxu0 0.0
    %83 = vmatpush1.msra.mxu0 %v40
    %84 = vmatprep.subr.mxu0 0.0
    %85 = vmatpush2.msra.mxu0 0.0
    %86 = vmatprep.subr.mxu0 0.0
    %87 = vmatpush2.msra.mxu0 0.0
    %88 = vmatprep.subr.mxu0 0.0
    %89 = vmatpush2.msra.mxu0 0.0
    %90 = vmatprep.subr.mxu0 0.0
    %91 = vmatpush2.msra.mxu0 0.0
    %92 = vmatprep.subr.mxu0 0.0
    %93 = vmatpush2.msra.mxu0 0.0
    %94 = vmatprep.subr.mxu0 0.0
    %95 = vmatpush2.msra.mxu0 0.0
    %96 = vmatprep.subr.mxu0 0.0
    %97 = vmatpush2.msra.mxu0 0.0
    %98 = vmatprep.subr.mxu0 0.0
    %99 = vmatpush2.msra.mxu0 0.0
    %100 = vmatprep.subr.mxu0 0.0
    %101 = vmatpush2.msra.mxu0 0.0
    %102 = vmatprep.subr.mxu0 0.0
    %103 = vmatpush2.msra.mxu0 0.0
    %104 = vmatprep.subr.mxu0 0.0
    %105 = vmatpush2.msra.mxu0 0.0
    %106 = vmatprep.subr.mxu0 0.0
    %107 = vmatpush2.msra.mxu0 0.0
    %108 = vmatprep.subr.mxu0 0.0
    %109 = vmatpush2.msra.mxu0 0.0
    %110 = vmatprep.subr.mxu0 0.0
    %111 = vmatpush2.msra.mxu0 0.0
    %112 = vmatprep.subr.mxu0 0.0
    %113 = vmatpush2.msra.mxu0 0.0
    %114 = vmatprep.subr.mxu0 0.0
    %115 = vmatpush2.msra.mxu0 0.0
    %116 = vmatprep.mubr.f32.mxu0 0.0
    %117 = vmatmul.mubr.f32.gmra.mxu0 %v50
    %v118 = vpop.f32.mrf.mxu0
    %v119 = vadd.f32 %v46, %v118
    %v120 = vpop.f32.mrf.mxu0
    %121 = vdwg.mxu0
    %v122 = vand.u32 2147483647, %v119
    %vm123 = vcmp.le.f32.partialorder %v122, 0.7853982
    %vm124 = vcmp.lt.s32.totalorder %v119, 0
    %v125 = vand.u32 %v119, 2139095040
    %v126 = vshrl.u32 %v125, 23
    %v127 = vsub.s32 %v126, 127
    %v128 = vand.u32 2147483647, %v119
    %v129 = vand.u32 %v128, 8388607
    %v130 = vor.u32 %v129, 8388608
    %v131 = vsub.s32 0, %v130
    %v132 = vadd.s32 %v127, 1
    %vm133 = vcmp.gt.s32.totalorder %v132, 0
    %v134 = vsel %vm133, %v132, 0
    %v135 = vshrl.u32 %v134, 5
    %v136 = vand.u32 %v134, 31
    %v137 = vsub.s32 32, %v136
    %v138 = vshrl.u32 683565275, %v137
    %v139 = vshll.u32 683565275, %v136
    %v140 = vshrl.u32 2475754826, %v137
    %v141 = vor.u32 %v139, %v140
    %v142 = vshll.u32 2475754826, %v136
    %v143 = vshrl.u32 2131351028, %v137
    %v144 = vor.u32 %v142, %v143
    %v145 = vshll.u32 2131351028, %v136
    %v146 = vshrl.u32 2102212464, %v137
    %v147 = vor.u32 %v145, %v146
    %v148 = vshll.u32 2102212464, %v136
    %v149 = vshrl.u32 920167782, %v137
    %v150 = vor.u32 %v148, %v149
    %v151 = vshll.u32 920167782, %v136
    %v152 = vshrl.u32 1326507024, %v137
    %v153 = vor.u32 %v151, %v152
    %vm154 = vcmp.lt.s32.totalorder %v135, 1
    %vm155 = vcmp.lt.s32.totalorder %v135, 2
    %vm156 = vcmp.lt.s32.totalorder %v135, 3
    %vm157 = vcmp.lt.s32.totalorder %v135, 4
    %v158 = vsel %vm154, %v138, %v141
    %v159 = vsel %vm157, %v147, 2102212464
    %v160 = vsel %vm156, %v144, %v159
    %v161 = vsel %vm155, %v158, %v160
    %v162 = vsel %vm154, %v141, %v144
    %v163 = vsel %vm157, %v150, 920167782
    %v164 = vsel %vm156, %v147, %v163
    %v165 = vsel %vm155, %v162, %v164
    %v166 = vsel %vm154, %v144, %v147
    %v167 = vsel %vm157, %v153, 1326507024
    %v168 = vsel %vm156, %v150, %v167
    %v169 = vsel %vm155, %v166, %v168
    %v170 = vshll.u32 %v130, 8
    %v171 = vmul.u32.u64.compose %v170, %v169
    %v172 = vextract.low.u32 %v171
    %v173 = vextract.high.u32 %v171
    %v174 = vmul.u32.u64.compose %v170, %v165
    %v175 = vextract.low.u32 %v174
    %v176 = vextract.high.u32 %v174
    %v177 = vmul.u32 %v170, %v161
    %v178 = vadd.s32 %v173, %v175
    %vm179 = vc.u32 %v173, %v175
    %v180 = vadd.s32 %v176, 1
    %v181 = vsel %vm179, %v180, %v176
    %v182 = vadd.s32 %v177, %v181
    %v183 = vadd.s32 %v182, 536870912
    %v184 = vshrl.u32 %v183, 30
    %v185 = vshll.u32 %v184, 30
    %v186 = vsub.s32 %v182, %v185
    %vm187 = vcmp.lt.s32.totalorder %v186, 0
    %v188 = vsub.s32 0, %v186
    %v189 = vsel %vm187, %v188, %v186
    %v190 = vclz %v189
    %v191 = vsub.s32 %v190, 2
    %vm192 = vcmp.gt.s32.totalorder 0, %v191
    %v193 = vsel %vm192, 0, %v191
    %v194 = vsub.s32 32, %v193
    %v195 = vshll.u32 %v186, %v193
    %v196 = vshrl.u32 %v178, %v194
    %v197 = vor.u32 %v195, %v196
    %v198 = vsub.s32 4294967266, %v193
    %v199 = vadd.s32 %v198, 127
    %v200 = vshll.u32 %v199, 23
    %v201 = vor.u32 4788187, %v200
    %v202 = vand.u32 2147483647, %v201
    %v204 = vcvt.s32.f32 %v197
    %v205 = vmul.f32 %v204, %v202
    %v206 = vxor.u32 %v205, 2147483648
    %v207 = vsel %vm124, %v206, %v205
    %v208 = vsub.s32 4, %v184
    %v209 = vsel %vm124, %v208, %v184
    %v210 = vsel %vm123, %v119, %v207
    %v211 = vsel %vm123, 0, %v209
    %v212 = vcosq.f32.pop %v210
    %v213 = vsinq.f32.pop %v210
    %vm214 = vweird.f32 %v119
    %v215 = vand.u32 %v211, 3
    %vm216 = vcmp.lt.s32.totalorder %v215, 2
    %vm217 = vcmp.eq.s32.totalorder %v215, 0
    %v218 = vxor.u32 %v213, 2147483648
    %v219 = vsel %vm217, %v212, %v218
    %vm220 = vcmp.eq.s32.totalorder %v215, 2
    %v221 = vxor.u32 %v212, 2147483648
    %v222 = vsel %vm220, %v221, %v213
    %v223 = vsel %vm216, %v219, %v222
    %v224 = vsel %vm214, nan, %v223
    %225 = vst [vmem:[#allocation7] sm:$0xf] %v224
    // Predicated region
    $region22: #{tpu_custom_call.1} parent=1 // pred_check
      _
    $region23: #{tpu_custom_call.1} parent=1 // pred_check_branch
      %227 = sbr.rel (0) target = $region25
    $region24: #{tpu_custom_call.1} parent=1 // pred_region
      %s229 = ssub.s32 64, 64
      %230 = vsyncadd [#allocation4], %s229
      %s232 = sshll.u32 [#allocation7], 4
      %s233 = int_to_ptr.vmem [resolvable:$true] %s232
      %235 = dma.vmem_to_hbm [thread:$0]  %s233, 64, %s3, [#allocation4]
    $region25: #{tpu_custom_call.1} parent=1 // pred_fallthru
      _
    // Predicated region
    $region26: #{tpu_custom_call.1} parent=1 // pred_check
      _
    $region27: #{tpu_custom_call.1} parent=1 // pred_check_branch
      %237 = sbr.rel (0) target = $region29
    $region28: #{tpu_custom_call.1} parent=1 // pred_region
      %238 = dma.done [#allocation4], 64
    $region29: #{tpu_custom_call.1} parent=1 // pred_fallthru
      _
    %239 = vsyncpa [#allocation3], 1
    %240 = vsyncpa [#allocation6], 1
    %241 = vsyncpa [#allocation4], 1

</llo_original>
